<compile_context>
chip_gen: v7x
topology: tpu7x:2x2x1
jax: 0.10.0
libtpu: 0.0.40
codegen_flags: <defaults>
</compile_context>

<pallas_src>
import functools

import jax
import jax.numpy as jnp
from jax.experimental import pallas as pl
from jax.experimental.pallas import tpu as pltpu


def _round_up(x: int, m: int) -> int:
    return ((x + m - 1) // m) * m


def _pick_tile(total: int, unit: int, max_tile: int) -> int:
    """Largest multiple-of-`unit` divisor of `total` that is <= max_tile.

    `total` is assumed to already be a multiple of `unit`, so the result
    always divides `total` exactly (no round-up-to-tile padding waste).
    """
    best = unit
    t = unit
    cap = min(total, max(max_tile, unit))
    while t <= cap:
        if total % t == 0:
            best = t
        t += unit
    return best


def rnncell_kernel(x_ref, h_ref, wih_ref, whh_ref, b_ref, out_ref):
    """One (tm, tn) output tile; full contraction per tile (no K axis)."""
    acc = jnp.dot(x_ref[...], wih_ref[...], preferred_element_type=jnp.float32)
    acc = acc + jnp.dot(h_ref[...], whh_ref[...],
                        preferred_element_type=jnp.float32)
    # Pre-folded bias (b_ih + b_hh, f32) added once; tanh in f32, cast on store.
    out_ref[...] = jnp.tanh(acc + b_ref[...].astype(jnp.float32)).astype(
        out_ref.dtype)


def prepare_rnncell_params(w_ih, w_hh, b_ih, b_hh, param_dtype=None):
    """One-time parameter prep: transpose, bias fold, AND lane-aligned padding.

    w_ih: (H, I), w_hh: (H, H), b_ih/b_hh: (H,)
    Returns:
      w_ih_t_p: (Ip, Hp)  == zero-padded W_ih^T   (Ip = round_up(I, 128))
      w_hh_t_p: (Hp, Hp)  == zero-padded W_hh^T   (Hp = round_up(H, 128))
      b_p:      (1, Hp)   == zero-padded (b_ih + b_hh), f32

    param_dtype=jnp.bfloat16 halves weight HBM bytes (fast MXU path on
    v6e/v7x); leave None to keep the original dtype.
    """
    w_ih = jnp.asarray(w_ih)
    w_hh = jnp.asarray(w_hh)
    b_ih = jnp.asarray(b_ih)
    b_hh = jnp.asarray(b_hh)
    if param_dtype is not None:
        w_ih = w_ih.astype(param_dtype)
        w_hh = w_hh.astype(param_dtype)

    H, I = w_ih.shape
    Ip = _round_up(I, 128)
    Hp = _round_up(H, 128)

    w_ih_t_p = jnp.zeros((Ip, Hp), w_ih.dtype).at[:I, :H].set(w_ih.T)
    w_hh_t_p = jnp.zeros((Hp, Hp), w_hh.dtype).at[:H, :H].set(w_hh.T)
    b_p = jnp.zeros((1, Hp), jnp.float32).at[0, :H].set(
        b_ih.astype(jnp.float32) + b_hh.astype(jnp.float32))
    return w_ih_t_p, w_hh_t_p, b_p


@functools.partial(jax.jit, static_argnames=("tm", "tn"))
def rnncell_forward(x, h, w_ih_t_p, w_hh_t_p, b_p, *, tm=128, tn=512):
    """x: (B, I), h: (B, H); padded params from prepare_rnncell_params.

    Returns h' with shape (B, H) and x.dtype.
    """
    B, I = x.shape
    H = h.shape[1]
    Ip, Hp = w_ih_t_p.shape
    assert w_hh_t_p.shape == (Hp, Hp) and b_p.shape == (1, Hp)
    assert Ip >= I and Hp >= H

    # bf16 activations need 16-row sublane tiles; f32 needs 8.
    sub = 16 if x.dtype == jnp.bfloat16 else 8
    Bp = _round_up(B, sub)

    # Tiles that exactly divide the (minimally padded) dims: no tile waste,
    # lane-dense unmasked output stores (tn is always a multiple of 128).
    tm_eff = _pick_tile(Bp, sub, tm)
    tn_eff = _pick_tile(Hp, 128, tn)
    # v7x has 2 TensorCores sharded along "parallel" axes: guarantee >= 2
    # N blocks whenever H is large enough (no effect on v5e/v6e).
    if tn_eff == Hp and Hp >= 256:
        tn_eff = _pick_tile(Hp, 128, Hp // 2)

    # Pad activations only when needed, and only to the minimal (8/16, 128)
    # layout (zero columns multiply zero weight rows -> no effect on result).
    if (Bp, Ip) != (B, I):
        x_p = jnp.zeros((Bp, Ip), x.dtype).at[:B, :I].set(x)
    else:
        x_p = x
    if (Bp, Hp) != (B, H):
        h_p = jnp.zeros((Bp, Hp), h.dtype).at[:B, :H].set(h)
    else:
        h_p = h

    grid = (Bp // tm_eff, Hp // tn_eff)

    # VMEM footprint per step (double-buffered) at tm=128, tn=512, f32,
    # I=H=1024 is ~10.5 MiB: fits the scoped default on v5e/v6e/v7x.
    out_p = pl.pallas_call(
        rnncell_kernel,
        out_shape=jax.ShapeDtypeStruct((Bp, Hp), x.dtype),
        grid_spec=pltpu.PrefetchScalarGridSpec(
            num_scalar_prefetch=0,
            grid=grid,
            in_specs=[
                pl.BlockSpec((tm_eff, Ip), lambda i, j: (i, 0)),   # x tile
                pl.BlockSpec((tm_eff, Hp), lambda i, j: (i, 0)),   # h tile
                pl.BlockSpec((Ip, tn_eff), lambda i, j: (0, j)),   # W_ih^T tile
                pl.BlockSpec((Hp, tn_eff), lambda i, j: (0, j)),   # W_hh^T tile
                pl.BlockSpec((1, tn_eff), lambda i, j: (0, j)),    # fused bias
            ],
            out_specs=pl.BlockSpec((tm_eff, tn_eff), lambda i, j: (i, j)),
        ),
        compiler_params=pltpu.CompilerParams(
            dimension_semantics=("parallel", "parallel")
        ),
    )(x_p, h_p, w_ih_t_p, w_hh_t_p, b_p)

    if (Bp, Hp) != (B, H):
        return out_p[:B, :H]
    return out_p


if __name__ == "__main__":
    # Sizes implied by the module's defaults.
    batch_size = 1
    input_size = 4
    hidden_size = 4

    key = jax.random.PRNGKey(0)
    k_x, k_wih, k_whh, k_bih, k_bhh = jax.random.split(key, 5)

    # Deterministic init (PyTorch RNNCell uses U(-1/sqrt(H), 1/sqrt(H))).
    bound = 1.0 / (hidden_size ** 0.5)
    w_ih = jax.random.uniform(
        k_wih, (hidden_size, input_size), jnp.float32, -bound, bound
    )
    w_hh = jax.random.uniform(
        k_whh, (hidden_size, hidden_size), jnp.float32, -bound, bound
    )
    b_ih = jax.random.uniform(k_bih, (hidden_size,), jnp.float32, -bound, bound)
    b_hh = jax.random.uniform(k_bhh, (hidden_size,), jnp.float32, -bound, bound)

    x = jax.random.normal(k_x, (batch_size, input_size), jnp.float32)
    h0 = jnp.zeros((batch_size, hidden_size), jnp.float32)  # Model.init_hidden()

    # One-time parameter prep (transpose / pad / bias fold) — off the step path.
    w_ih_t_p, w_hh_t_p, b_p = prepare_rnncell_params(w_ih, w_hh, b_ih, b_hh)

    h1 = rnncell_forward(x, h0, w_ih_t_p, w_hh_t_p, b_p)
    jax.block_until_ready(h1)

    # Reference check in plain JAX (torch.nn.RNNCell semantics).
    ref = jnp.tanh(x @ w_ih.T + b_ih + h0 @ w_hh.T + b_hh)
    assert h1.shape == (batch_size, hidden_size)
    assert jnp.allclose(h1, ref, atol=1e-5), (h1, ref)

    print("KERNEL_OK")
</pallas_src>

<mosaic_0001>
module attributes {stable_mosaic.version = 11 : i64} {
  func.func @rnncell_kernel(%arg0: i32, %arg1: i32, %arg2: memref<8x128xf32, #tpu.memory_space<vmem>>, %arg3: memref<8x128xf32, #tpu.memory_space<vmem>>, %arg4: memref<128x128xf32, #tpu.memory_space<vmem>>, %arg5: memref<128x128xf32, #tpu.memory_space<vmem>>, %arg6: memref<1x128xf32, #tpu.memory_space<vmem>>, %arg7: memref<8x128xf32, #tpu.memory_space<vmem>>) attributes {dimension_semantics = [#tpu.dimension_semantics<parallel>, #tpu.dimension_semantics<parallel>], iteration_bounds = array<i64: 1, 1>, scalar_prefetch = 0 : i64, scratch_operands = 0 : i64, tpu.core_type = #tpu.core_type<tc>, window_params = [{transform_indices = @transform_0, window_bounds = array<i64: 8, 128>}, {transform_indices = @transform_1, window_bounds = array<i64: 8, 128>}, {transform_indices = @transform_2, window_bounds = array<i64: 128, 128>}, {transform_indices = @transform_3, window_bounds = array<i64: 128, 128>}, {transform_indices = @transform_4, window_bounds = array<i64: 1, 128>}, {transform_indices = @transform_5, window_bounds = array<i64: 8, 128>}]} {
    %c0 = arith.constant 0 : index
    %c0_0 = arith.constant 0 : index
    %0 = vector.load %arg2[%c0, %c0_0] : memref<8x128xf32, #tpu.memory_space<vmem>>, vector<8x128xf32>
    %c0_1 = arith.constant 0 : index
    %c0_2 = arith.constant 0 : index
    %1 = vector.load %arg4[%c0_1, %c0_2] : memref<128x128xf32, #tpu.memory_space<vmem>>, vector<128x128xf32>
    %cst = arith.constant dense<0.000000e+00> : vector<8x128xf32>
    %2 = tpu.matmul %0, %1, %cst {dimension_numbers = #tpu.dot_dimension_numbers<[1], [0], [0], [1], [0, 0, 1, 1], [], []>} : vector<8x128xf32>, vector<128x128xf32>, vector<8x128xf32> -> vector<8x128xf32>
    %c0_3 = arith.constant 0 : index
    %c0_4 = arith.constant 0 : index
    %3 = vector.load %arg3[%c0_3, %c0_4] : memref<8x128xf32, #tpu.memory_space<vmem>>, vector<8x128xf32>
    %c0_5 = arith.constant 0 : index
    %c0_6 = arith.constant 0 : index
    %4 = vector.load %arg5[%c0_5, %c0_6] : memref<128x128xf32, #tpu.memory_space<vmem>>, vector<128x128xf32>
    %cst_7 = arith.constant dense<0.000000e+00> : vector<8x128xf32>
    %5 = tpu.matmul %3, %4, %cst_7 {dimension_numbers = #tpu.dot_dimension_numbers<[1], [0], [0], [1], [0, 0, 1, 1], [], []>} : vector<8x128xf32>, vector<128x128xf32>, vector<8x128xf32> -> vector<8x128xf32>
    %6 = arith.addf %2, %5 : vector<8x128xf32>
    %c0_8 = arith.constant 0 : index
    %c0_9 = arith.constant 0 : index
    %7 = vector.load %arg6[%c0_8, %c0_9] : memref<1x128xf32, #tpu.memory_space<vmem>>, vector<1x128xf32>
    %8 = vector.broadcast %7 : vector<1x128xf32> to vector<8x128xf32>
    %9 = arith.addf %6, %8 : vector<8x128xf32>
    %10 = math.tanh %9 : vector<8x128xf32>
    %c0_10 = arith.constant 0 : index
    %c0_11 = arith.constant 0 : index
    %11 = vector.load %arg7[%c0_10, %c0_11] : memref<8x128xf32, #tpu.memory_space<vmem>>, vector<8x128xf32>
    tpu.vector_store %arg7[%c0_10, %c0_11], %10 {strides = array<i32>} : memref<8x128xf32, #tpu.memory_space<vmem>>, vector<8x128xf32>,
    return
  }
  func.func @transform_0(%arg0: i32, %arg1: i32) -> (i32, i32) {
    %c0_i32 = arith.constant 0 : i32
    %c0_i32_0 = arith.constant 0 : i32
    return %arg0, %c0_i32 : i32, i32
  }
  func.func @transform_1(%arg0: i32, %arg1: i32) -> (i32, i32) {
    %c0_i32 = arith.constant 0 : i32
    %c0_i32_0 = arith.constant 0 : i32
    return %arg0, %c0_i32 : i32, i32
  }
  func.func @transform_2(%arg0: i32, %arg1: i32) -> (i32, i32) {
    %c0_i32 = arith.constant 0 : i32
    %c0_i32_0 = arith.constant 0 : i32
    return %c0_i32, %arg1 : i32, i32
  }
  func.func @transform_3(%arg0: i32, %arg1: i32) -> (i32, i32) {
    %c0_i32 = arith.constant 0 : i32
    %c0_i32_0 = arith.constant 0 : i32
    return %c0_i32, %arg1 : i32, i32
  }
  func.func @transform_4(%arg0: i32, %arg1: i32) -> (i32, i32) {
    %c0_i32 = arith.constant 0 : i32
    %c0_i32_0 = arith.constant 0 : i32
    return %c0_i32, %arg1 : i32, i32
  }
  func.func @transform_5(%arg0: i32, %arg1: i32) -> (i32, i32) {
    %c0_i32 = arith.constant 0 : i32
    return %arg0, %arg1 : i32, i32
  }
}

</mosaic_0001>

<llo_original>
// kernel: rnncell_forward.1
$region0: #{rnncell_forward.1}
  #allocation0 [shape = 'u32[]', space=smem, size = 0x4, offset = 0x4, fixed_abs, tag = 'smem constant byte address 0x4 - core index']
  #allocation1 [shape = 'u32[144,128]{1,0:T(1,128)}', space=vmem, size = 0x12000, scoped, tag = 'internal scratch']
  %s0 = inlined_call_operand.vmem [shape: f32[8,128], index: 0, kind: input, shape index: {}]
  %s1 = inlined_call_operand.vmem [shape: f32[8,128], index: 1, kind: input, shape index: {}]
  %s2 = inlined_call_operand.hbm [shape: f32[128,128], index: 2, kind: input, shape index: {}]
  %s3 = inlined_call_operand.hbm [shape: f32[128,128], index: 3, kind: input, shape index: {}]
  %s4 = inlined_call_operand.vmem [shape: f32[1,128], index: 4, kind: input, shape index: {}]
  %s5 = inlined_call_operand.vmem [shape: f32[8,128], index: 5, kind: output, shape index: {}]
  %s6 = sld [smem:[#allocation0]]
  $region38: #{rnncell_forward.1} parent=0
    _
  %s8 = ssub.s32 1, %s6
  %s9 = scalar_select 0, %s8, %s6
  $region1: #{rnncell_forward.1} parent=0
    #allocation2 [shape = 'u8[65536]{0}', space=vmem, size = 0x10000, scoped, tag = 'input window, operand 2, single buffered']
    #allocation3 [shape = 's32[1]{0}', space=sflag, size = 0x4, scoped, tag = 'scoped memory for rnncell_forward.1']
    #allocation4 [shape = 'u8[65536]{0}', space=vmem, size = 0x10000, scoped, tag = 'input window, operand 3, single buffered']
    #allocation5 [shape = 's32[1]{0}', space=sflag, size = 0x4, scoped, tag = 'scoped memory for rnncell_forward.1']
    %10 = vsyncpa [#allocation3], 0
    %11 = vsyncpa [#allocation5], 0
    // Predicated region
    $region2: #{rnncell_forward.1} parent=1 // pred_check
      _
    $region3: #{rnncell_forward.1} parent=1 // pred_check_branch
      %13 = sbr.rel (0) target = $region5
    $region4: #{rnncell_forward.1} parent=1 // pred_region
      _
    $region5: #{rnncell_forward.1} parent=1 // pred_fallthru
      _
    // Predicated region
    $region6: #{rnncell_forward.1} parent=1 // pred_check
      _
    $region7: #{rnncell_forward.1} parent=1 // pred_check_branch
      %15 = sbr.rel (0) target = $region9
    $region8: #{rnncell_forward.1} parent=1 // pred_region
      _
    $region9: #{rnncell_forward.1} parent=1 // pred_fallthru
      _
    // Predicated region
    $region10: #{rnncell_forward.1} parent=1 // pred_check
      _
    $region11: #{rnncell_forward.1} parent=1 // pred_check_branch
      %17 = sbr.rel (0) target = $region13
    $region12: #{rnncell_forward.1} parent=1 // pred_region
      %s19 = ssub.s32 2048, 2048
      %20 = vsyncadd [#allocation3], %s19
      %s21 = sshll.u32 [#allocation2], 4
      %s22 = int_to_ptr.vmem [resolvable:$true] %s21
      %27 = dma.hbm_to_vmem [thread:$0]  %s2, 2048, %s22, [#allocation3], 128, 128, 8
    $region13: #{rnncell_forward.1} parent=1 // pred_fallthru
      _
    // Predicated region
    $region14: #{rnncell_forward.1} parent=1 // pred_check
      _
    $region15: #{rnncell_forward.1} parent=1 // pred_check_branch
      %29 = sbr.rel (0) target = $region17
    $region16: #{rnncell_forward.1} parent=1 // pred_region
      %s31 = ssub.s32 2048, 2048
      %32 = vsyncadd [#allocation5], %s31
      %s33 = sshll.u32 [#allocation4], 4
      %s34 = int_to_ptr.vmem [resolvable:$true] %s33
      %39 = dma.hbm_to_vmem [thread:$0]  %s3, 2048, %s34, [#allocation5], 128, 128, 8
    $region17: #{rnncell_forward.1} parent=1 // pred_fallthru
      _
    // Predicated region
    $region18: #{rnncell_forward.1} parent=1 // pred_check
      _
    $region19: #{rnncell_forward.1} parent=1 // pred_check_branch
      %41 = sbr.rel (0) target = $region21
    $region20: #{rnncell_forward.1} parent=1 // pred_region
      _
    $region21: #{rnncell_forward.1} parent=1 // pred_fallthru
      _
    // Predicated region
    $region22: #{rnncell_forward.1} parent=1 // pred_check
      _
    $region23: #{rnncell_forward.1} parent=1 // pred_check_branch
      %43 = sbr.rel (0) target = $region25
    $region24: #{rnncell_forward.1} parent=1 // pred_region
      %44 = dma.done [#allocation3], 2048
    $region25: #{rnncell_forward.1} parent=1 // pred_fallthru
      _
    // Predicated region
    $region26: #{rnncell_forward.1} parent=1 // pred_check
      _
    $region27: #{rnncell_forward.1} parent=1 // pred_check_branch
      %46 = sbr.rel (0) target = $region29
    $region28: #{rnncell_forward.1} parent=1 // pred_region
      %47 = dma.done [#allocation5], 2048
    $region29: #{rnncell_forward.1} parent=1 // pred_fallthru
      _
    %v48 = vld [vmem:[%s0] sm:$0xff]
    %v49 = vld [vmem:[#allocation2] sm:$0xff]
    %v50 = vld [vmem:[#allocation2 + $0x8] sm:$0xff]
    %v51 = vld [vmem:[#allocation2 + $0x10] sm:$0xff]
    %v52 = vld [vmem:[#allocation2 + $0x18] sm:$0xff]
    %v53 = vld [vmem:[#allocation2 + $0x20] sm:$0xff]
    %v54 = vld [vmem:[#allocation2 + $0x28] sm:$0xff]
    %v55 = vld [vmem:[#allocation2 + $0x30] sm:$0xff]
    %v56 = vld [vmem:[#allocation2 + $0x38] sm:$0xff]
    %v57 = vld [vmem:[#allocation2 + $0x40] sm:$0xff]
    %v58 = vld [vmem:[#allocation2 + $0x48] sm:$0xff]
    %v59 = vld [vmem:[#allocation2 + $0x50] sm:$0xff]
    %v60 = vld [vmem:[#allocation2 + $0x58] sm:$0xff]
    %v61 = vld [vmem:[#allocation2 + $0x60] sm:$0xff]
    %v62 = vld [vmem:[#allocation2 + $0x68] sm:$0xff]
    %v63 = vld [vmem:[#allocation2 + $0x70] sm:$0xff]
    %v64 = vld [vmem:[#allocation2 + $0x78] sm:$0xff]
    %v65 = vld [vmem:[%s1] sm:$0xff]
    %v66 = vld [vmem:[#allocation4] sm:$0xff]
    %v67 = vld [vmem:[#allocation4 + $0x8] sm:$0xff]
    %v68 = vld [vmem:[#allocation4 + $0x10] sm:$0xff]
    %v69 = vld [vmem:[#allocation4 + $0x18] sm:$0xff]
    %v70 = vld [vmem:[#allocation4 + $0x20] sm:$0xff]
    %v71 = vld [vmem:[#allocation4 + $0x28] sm:$0xff]
    %v72 = vld [vmem:[#allocation4 + $0x30] sm:$0xff]
    %v73 = vld [vmem:[#allocation4 + $0x38] sm:$0xff]
    %v74 = vld [vmem:[#allocation4 + $0x40] sm:$0xff]
    %v75 = vld [vmem:[#allocation4 + $0x48] sm:$0xff]
    %v76 = vld [vmem:[#allocation4 + $0x50] sm:$0xff]
    %v77 = vld [vmem:[#allocation4 + $0x58] sm:$0xff]
    %v78 = vld [vmem:[#allocation4 + $0x60] sm:$0xff]
    %v79 = vld [vmem:[#allocation4 + $0x68] sm:$0xff]
    %v80 = vld [vmem:[#allocation4 + $0x70] sm:$0xff]
    %v81 = vld [vmem:[#allocation4 + $0x78] sm:$0xff]
    %82 = vmatprep.subr.mxu0 0.0
    %83 = vmatpush1.msra.mxu0 %v66
    %84 = vmatprep.subr.mxu0 0.0
    %85 = vmatpush1.msra.mxu0 %v67
    %86 = vmatprep.subr.mxu0 0.0
    %87 = vmatpush1.msra.mxu0 %v68
    %88 = vmatprep.subr.mxu0 0.0
    %89 = vmatpush1.msra.mxu0 %v69
    %90 = vmatprep.subr.mxu0 0.0
    %91 = vmatpush1.msra.mxu0 %v70
    %92 = vmatprep.subr.mxu0 0.0
    %93 = vmatpush1.msra.mxu0 %v71
    %94 = vmatprep.subr.mxu0 0.0
    %95 = vmatpush1.msra.mxu0 %v72
    %96 = vmatprep.subr.mxu0 0.0
    %97 = vmatpush1.msra.mxu0 %v73
    %98 = vmatprep.subr.mxu0 0.0
    %99 = vmatpush1.msra.mxu0 %v74
    %100 = vmatprep.subr.mxu0 0.0
    %101 = vmatpush1.msra.mxu0 %v75
    %102 = vmatprep.subr.mxu0 0.0
    %103 = vmatpush1.msra.mxu0 %v76
    %104 = vmatprep.subr.mxu0 0.0
    %105 = vmatpush1.msra.mxu0 %v77
    %106 = vmatprep.subr.mxu0 0.0
    %107 = vmatpush1.msra.mxu0 %v78
    %108 = vmatprep.subr.mxu0 0.0
    %109 = vmatpush1.msra.mxu0 %v79
    %110 = vmatprep.subr.mxu0 0.0
    %111 = vmatpush1.msra.mxu0 %v80
    %112 = vmatprep.subr.mxu0 0.0
    %113 = vmatpush1.msra.mxu0 %v81
    %114 = vmatprep.subr.mxu0 0.0
    %115 = vmatpush1.msra.mxu0 0.0
    %116 = vmatprep.subr.mxu0 0.0
    %117 = vmatpush1.msra.mxu0 0.0
    %118 = vmatprep.subr.mxu0 0.0
    %119 = vmatpush1.msra.mxu0 0.0
    %120 = vmatprep.subr.mxu0 0.0
    %121 = vmatpush1.msra.mxu0 0.0
    %122 = vmatprep.subr.mxu0 0.0
    %123 = vmatpush1.msra.mxu0 0.0
    %124 = vmatprep.subr.mxu0 0.0
    %125 = vmatpush1.msra.mxu0 0.0
    %126 = vmatprep.subr.mxu0 0.0
    %127 = vmatpush1.msra.mxu0 0.0
    %128 = vmatprep.subr.mxu0 0.0
    %129 = vmatpush1.msra.mxu0 0.0
    %130 = vmatprep.subr.mxu0 0.0
    %131 = vmatpush1.msra.mxu0 0.0
    %132 = vmatprep.subr.mxu0 0.0
    %133 = vmatpush1.msra.mxu0 0.0
    %134 = vmatprep.subr.mxu0 0.0
    %135 = vmatpush1.msra.mxu0 0.0
    %136 = vmatprep.subr.mxu0 0.0
    %137 = vmatpush1.msra.mxu0 0.0
    %138 = vmatprep.subr.mxu0 0.0
    %139 = vmatpush1.msra.mxu0 0.0
    %140 = vmatprep.subr.mxu0 0.0
    %141 = vmatpush1.msra.mxu0 0.0
    %142 = vmatprep.subr.mxu0 0.0
    %143 = vmatpush1.msra.mxu0 0.0
    %144 = vmatprep.subr.mxu0 0.0
    %145 = vmatpush1.msra.mxu0 0.0
    %146 = vmatprep.mubr.f32.mxu0 0.0
    %147 = vmatmul.mubr.f32.gmra.mrb[0].mxu0 %v65
    %v148 = vpop.f32.mrb[0].mxu0
    %v149 = vadd.f32 0.0, %v148
    %v150 = vpop.f32.mrb[0].mxu0
    %151 = vdwg.mxu0
    %152 = vmatprep.subr.mxu0 0.0
    %153 = vmatpush1.msra.mxu0 %v49
    %154 = vmatprep.subr.mxu0 0.0
    %155 = vmatpush1.msra.mxu0 %v50
    %156 = vmatprep.subr.mxu0 0.0
    %157 = vmatpush1.msra.mxu0 %v51
    %158 = vmatprep.subr.mxu0 0.0
    %159 = vmatpush1.msra.mxu0 %v52
    %160 = vmatprep.subr.mxu0 0.0
    %161 = vmatpush1.msra.mxu0 %v53
    %162 = vmatprep.subr.mxu0 0.0
    %163 = vmatpush1.msra.mxu0 %v54
    %164 = vmatprep.subr.mxu0 0.0
    %165 = vmatpush1.msra.mxu0 %v55
    %166 = vmatprep.subr.mxu0 0.0
    %167 = vmatpush1.msra.mxu0 %v56
    %168 = vmatprep.subr.mxu0 0.0
    %169 = vmatpush1.msra.mxu0 %v57
    %170 = vmatprep.subr.mxu0 0.0
    %171 = vmatpush1.msra.mxu0 %v58
    %172 = vmatprep.subr.mxu0 0.0
    %173 = vmatpush1.msra.mxu0 %v59
    %174 = vmatprep.subr.mxu0 0.0
    %175 = vmatpush1.msra.mxu0 %v60
    %176 = vmatprep.subr.mxu0 0.0
    %177 = vmatpush1.msra.mxu0 %v61
    %178 = vmatprep.subr.mxu0 0.0
    %179 = vmatpush1.msra.mxu0 %v62
    %180 = vmatprep.subr.mxu0 0.0
    %181 = vmatpush1.msra.mxu0 %v63
    %182 = vmatprep.subr.mxu0 0.0
    %183 = vmatpush1.msra.mxu0 %v64
    %184 = vmatprep.subr.mxu0 0.0
    %185 = vmatpush1.msra.mxu0 0.0
    %186 = vmatprep.subr.mxu0 0.0
    %187 = vmatpush1.msra.mxu0 0.0
    %188 = vmatprep.subr.mxu0 0.0
    %189 = vmatpush1.msra.mxu0 0.0
    %190 = vmatprep.subr.mxu0 0.0
    %191 = vmatpush1.msra.mxu0 0.0
    %192 = vmatprep.subr.mxu0 0.0
    %193 = vmatpush1.msra.mxu0 0.0
    %194 = vmatprep.subr.mxu0 0.0
    %195 = vmatpush1.msra.mxu0 0.0
    %196 = vmatprep.subr.mxu0 0.0
    %197 = vmatpush1.msra.mxu0 0.0
    %198 = vmatprep.subr.mxu0 0.0
    %199 = vmatpush1.msra.mxu0 0.0
    %200 = vmatprep.subr.mxu0 0.0
    %201 = vmatpush1.msra.mxu0 0.0
    %202 = vmatprep.subr.mxu0 0.0
    %203 = vmatpush1.msra.mxu0 0.0
    %204 = vmatprep.subr.mxu0 0.0
    %205 = vmatpush1.msra.mxu0 0.0
    %206 = vmatprep.subr.mxu0 0.0
    %207 = vmatpush1.msra.mxu0 0.0
    %208 = vmatprep.subr.mxu0 0.0
    %209 = vmatpush1.msra.mxu0 0.0
    %210 = vmatprep.subr.mxu0 0.0
    %211 = vmatpush1.msra.mxu0 0.0
    %212 = vmatprep.subr.mxu0 0.0
    %213 = vmatpush1.msra.mxu0 0.0
    %214 = vmatprep.subr.mxu0 0.0
    %215 = vmatpush1.msra.mxu0 0.0
    %216 = vmatprep.mubr.f32.mxu0 0.0
    %217 = vmatmul.mubr.f32.gmra.mrb[0].mxu0 %v48
    %v218 = vpop.f32.mrb[0].mxu0
    %v219 = vadd.f32 %v149, %v218
    %v220 = vpop.f32.mrb[0].mxu0
    %221 = vdwg.mxu0
    %v222 = vld [vmem:[%s4] sm:$0x1]
    %v224 = vlaneseq
    %v225 = vshrl.u32 %v224, 7
    %v226 = vsub.s32 0, %v225
    %v227 = vrot.slane %v222, %v226
    %v229 = vadd.f32 %v219, %v227
    %v230 = vtanh.pop %v229
    %231 = vst [vmem:[%s5] sm:$0xff] %v230
    // Predicated region
    $region30: #{rnncell_forward.1} parent=1 // pred_check
      _
    $region31: #{rnncell_forward.1} parent=1 // pred_check_branch
      %233 = sbr.rel (0) target = $region33
    $region32: #{rnncell_forward.1} parent=1 // pred_region
      _
    $region33: #{rnncell_forward.1} parent=1 // pred_fallthru
      _
    // Predicated region
    $region34: #{rnncell_forward.1} parent=1 // pred_check
      _
    $region35: #{rnncell_forward.1} parent=1 // pred_check_branch
      %235 = sbr.rel (0) target = $region37
    $region36: #{rnncell_forward.1} parent=1 // pred_region
      _
    $region37: #{rnncell_forward.1} parent=1 // pred_fallthru
      _
    %236 = vsyncpa [#allocation3], 1
    %237 = vsyncpa [#allocation5], 1

</llo_original>
